<compile_context>
chip_gen: v5e
topology: v5e:2x2
jax: 0.10.0
libtpu: 0.0.40
codegen_flags: <defaults>
</compile_context>

<pallas_src>
import functools

import jax
import jax.numpy as jnp
from jax.experimental import pallas as pl
from jax.experimental.pallas import tpu as pltpu


def _round_up(a, m):
    return (a + m - 1) // m * m


# ---------------------------------------------------------------------------
# Pass 1: circular conv rebuilt per tile from a (tl, C) block + 2 boundary
#         rows; accumulate per-channel centered sum-of-squares into a (1, D)
#         partial per parallel slice (core).
# ---------------------------------------------------------------------------
def _stats_kernel(x_ref, bnd_ref, w_ref, mean_ref, stats_ref, *,
                  n_seq, n_l, tl, seq_len, l_pad):
    @pl.when(pl.program_id(1) == 0)
    def _init():
        stats_ref[...] = jnp.zeros_like(stats_ref)

    x_blk = x_ref[...]                                           # (tl, C)
    # +/-1 time-shifted taps, edges taken from the tiny boundary block.
    x_prev = jnp.concatenate([bnd_ref[0:1, :], x_blk[:-1, :]], axis=0)
    x_next = jnp.concatenate([x_blk[1:, :], bnd_ref[1:2, :]], axis=0)

    y = (jnp.dot(x_prev, w_ref[0], preferred_element_type=jnp.float32)
         + jnp.dot(x_blk, w_ref[1], preferred_element_type=jnp.float32)
         + jnp.dot(x_next, w_ref[2], preferred_element_type=jnp.float32))
    d = y - mean_ref[...]                                        # centered

    if seq_len == l_pad:
        sq = d * d                                               # no pad rows
    else:
        # Mask wrap-padded rows (local time index >= seq_len).
        tile_idx = pl.program_id(0) * n_seq + pl.program_id(1)
        if n_l == 1:
            local_start = 0
        else:
            local_start = jax.lax.rem(tile_idx, jnp.int32(n_l)) * tl
        row = jax.lax.broadcasted_iota(jnp.int32, (tl, 1), 0)
        valid = (local_start + row) < seq_len
        sq = jnp.where(valid, d * d, 0.0)

    stats_ref[...] += jnp.sum(sq, axis=0, keepdims=True)


# ---------------------------------------------------------------------------
# Pass 2: recompute conv, apply folded BN (y * scale + shift), add positional
#         encoding. Fully independent per tile.
# ---------------------------------------------------------------------------
def _embed_kernel(x_ref, bnd_ref, w_ref, scale_ref, shift_ref, pe_ref, o_ref):
    x_blk = x_ref[...]                                           # (tl, C)
    x_prev = jnp.concatenate([bnd_ref[0:1, :], x_blk[:-1, :]], axis=0)
    x_next = jnp.concatenate([x_blk[1:, :], bnd_ref[1:2, :]], axis=0)

    y = (jnp.dot(x_prev, w_ref[0], preferred_element_type=jnp.float32)
         + jnp.dot(x_blk, w_ref[1], preferred_element_type=jnp.float32)
         + jnp.dot(x_next, w_ref[2], preferred_element_type=jnp.float32))
    o_ref[...] = (y * scale_ref[...] + shift_ref[...]
                  + pe_ref[...]).astype(o_ref.dtype)


def data_embedding(x, w, b, gamma, beta, pe, *, row_tile=1024,
                   out_dtype=jnp.float32):
    """Forward pass of DataEmbedding (Informer), training-stat BatchNorm.

    x:     (B, L, C)   channels-last input (what DataEmbedding.forward gets)
    w:     (3, C, D)   circular Conv1d(kernel=3) weight, tap-major
    b:     (1, D)      conv bias (unused: exactly cancelled by batch-stat BN)
    gamma: (1, D)      BatchNorm1d weight
    beta:  (1, D)      BatchNorm1d bias
    pe:    (L, D)      sinusoidal positional-encoding rows
    """
    del b  # cancelled exactly by the batch-mean subtraction in training BN
    B, L, C = x.shape
    D = w.shape[-1]

    x = x.astype(jnp.float32)
    w = w.astype(jnp.float32)

    # Time-tile size: multiple of 8 sublanes, at most row_tile.
    tl = min(row_tile, _round_up(L, 8))
    tl = _round_up(tl, 8)
    n_l = pl.cdiv(L, tl)
    l_pad = n_l * tl

    # Wrap-pad the time axis so in-tile "next" taps of real rows stay correct
    # (x_p[L] == x[0]); padded rows are masked in pass 1 and sliced off after.
    if l_pad != L:
        extra = jnp.take(x, jnp.arange(l_pad - L) % L, axis=1)
        x_p = jnp.concatenate([x, extra], axis=1)                # (B, l_pad, C)
        pe_p = jnp.pad(pe, ((0, l_pad - L), (0, 0)))
    else:
        x_p = x
        pe_p = pe

    # Per-tile boundary rows: prev tap of the tile's first row, next tap of
    # the tile's last row (circular over the ORIGINAL length L).
    starts = jnp.arange(n_l) * tl
    prev_idx = (starts - 1) % L
    next_idx = (starts + tl) % L
    bnd = jnp.stack([jnp.take(x, prev_idx, axis=1),
                     jnp.take(x, next_idx, axis=1)], axis=2)     # (B, n_l, 2, C)

    # Flattened views for pass 1 (fewer, fatter grid steps; l_pad % tl == 0 so
    # tiles never straddle a batch boundary).
    x_flat = x_p.reshape(B * l_pad, C)
    bnd_flat = bnd.reshape(B * n_l, 2, C)

    n_tiles = B * n_l
    n_par = 2 if (n_tiles >= 2 and n_tiles % 2 == 0) else 1      # v7x: 2 TCs
    n_seq = n_tiles // n_par

    # Batch mean of the (bias-less) conv output, computed outside the kernels:
    # circular shifts preserve the column sum, so
    #   sum_{b,l} y[b,l,:] = (sum_{b,l} x[b,l,:]) @ (W0 + W1 + W2).
    n = float(B * L)
    x_colsum = jnp.sum(x, axis=(0, 1))                           # (C,)
    mean = ((x_colsum @ (w[0] + w[1] + w[2])) / n).reshape(1, D)

    vmem_limit = 32 * 1024 * 1024  # explicit; safe on v5e/v6e and v7x (64 MiB)

    # ---- pass 1: per-core partial centered sum-of-squares -------------------
    stats_kernel = functools.partial(
        _stats_kernel, n_seq=n_seq, n_l=n_l, tl=tl, seq_len=L, l_pad=l_pad)

    partial_sq = pl.pallas_call(
        stats_kernel,
        out_shape=jax.ShapeDtypeStruct((n_par, 1, D), jnp.float32),
        grid_spec=pltpu.PrefetchScalarGridSpec(
            num_scalar_prefetch=0,
            grid=(n_par, n_seq),
            in_specs=[
                pl.BlockSpec((tl, C), lambda ci, si: (ci * n_seq + si, 0)),
                pl.BlockSpec((None, 2, C), lambda ci, si: (ci * n_seq + si, 0, 0)),
                pl.BlockSpec((3, C, D), lambda ci, si: (0, 0, 0)),
                pl.BlockSpec((1, D), lambda ci, si: (0, 0)),
            ],
            out_specs=pl.BlockSpec((None, 1, D), lambda ci, si: (ci, 0, 0)),
        ),
        compiler_params=pltpu.CompilerParams(
            dimension_semantics=("parallel", "arbitrary"),
            vmem_limit_bytes=vmem_limit),
    )(x_flat, bnd_flat, w, mean)

    var = jnp.maximum(jnp.sum(partial_sq, axis=0) / n, 0.0)      # (1, D)
    scale = gamma * jax.lax.rsqrt(var + 1e-5)                    # (1, D)
    shift = beta - mean * scale                                  # (1, D)

    # ---- pass 2: recompute conv, normalize, add positional encoding --------
    # Grid (time-tile, batch): pe's block index depends only on the outer
    # axis, so each pe tile is DMA'd once and reused across the batch.
    out = pl.pallas_call(
        _embed_kernel,
        out_shape=jax.ShapeDtypeStruct((B, l_pad, D), out_dtype),
        grid_spec=pltpu.PrefetchScalarGridSpec(
            num_scalar_prefetch=0,
            grid=(n_l, B),
            in_specs=[
                pl.BlockSpec((None, tl, C), lambda li, bi: (bi, li, 0)),
                pl.BlockSpec((None, None, 2, C), lambda li, bi: (bi, li, 0, 0)),
                pl.BlockSpec((3, C, D), lambda li, bi: (0, 0, 0)),
                pl.BlockSpec((1, D), lambda li, bi: (0, 0)),
                pl.BlockSpec((1, D), lambda li, bi: (0, 0)),
                pl.BlockSpec((tl, D), lambda li, bi: (li, 0)),
            ],
            out_specs=pl.BlockSpec((None, tl, D), lambda li, bi: (bi, li, 0)),
        ),
        compiler_params=pltpu.CompilerParams(
            dimension_semantics=("parallel", "parallel"),
            vmem_limit_bytes=vmem_limit),
    )(x_p, bnd, w, scale, shift, pe_p)

    return out[:, :L, :]


def positional_encoding(max_len, d_model):
    pos = jnp.arange(max_len, dtype=jnp.float32)[:, None]
    div = jnp.exp(jnp.arange(0, d_model, 2, dtype=jnp.float32)
                  * (-jnp.log(10000.0) / d_model))
    pe = jnp.zeros((max_len, d_model), dtype=jnp.float32)
    pe = pe.at[:, 0::2].set(jnp.sin(pos * div))
    pe = pe.at[:, 1::2].set(jnp.cos(pos * div))
    return pe


def reference(x, w, b, gamma, beta, pe):
    x_prev = jnp.roll(x, 1, axis=1)
    x_next = jnp.roll(x, -1, axis=1)
    y = (jnp.einsum("blc,cd->bld", x_prev, w[0])
         + jnp.einsum("blc,cd->bld", x, w[1])
         + jnp.einsum("blc,cd->bld", x_next, w[2])
         + b[None, :, :])
    mean = jnp.mean(y, axis=(0, 1), keepdims=True)
    var = jnp.mean((y - mean) ** 2, axis=(0, 1), keepdims=True)
    yn = (y - mean) * jax.lax.rsqrt(var + 1e-5) * gamma[None, :, :] + beta[None, :, :]
    return yn + pe[None, :, :]


if __name__ == "__main__":
    B, L, C, D = 2, 24, 4, 32  # batch, seq_len, c_in, d_model

    key = jax.random.PRNGKey(0)
    kx, kw, kb = jax.random.split(key, 3)

    x = jax.random.normal(kx, (B, L, C), dtype=jnp.float32)

    # Conv1d weight: PyTorch (d_model, c_in, 3) reorganized as (3, c_in, d_model)
    fan_in = C * 3
    bound = 1.0 / (fan_in ** 0.5)
    w = jax.random.uniform(kw, (3, C, D), jnp.float32, -bound, bound)
    b = jax.random.uniform(kb, (1, D), jnp.float32, -bound, bound)

    # BatchNorm1d affine defaults (weight=1, bias=0)
    gamma = jnp.ones((1, D), dtype=jnp.float32)
    beta = jnp.zeros((1, D), dtype=jnp.float32)

    pe = positional_encoding(5000, D)[:L, :]

    # row_tile=16 exercises multi-tile time axis, wrap padding (L=24 -> 32),
    # boundary taps and the 2-way parallel stats partials.
    out = data_embedding(x, w, b, gamma, beta, pe, row_tile=16)
    out = jax.block_until_ready(out)

    ref = reference(x, w, b, gamma, beta, pe)
    assert out.shape == (B, L, D)
    assert jnp.allclose(out, ref, atol=2e-4, rtol=2e-4)

    print("KERNEL_OK")
</pallas_src>

<mosaic_0001>
module attributes {stable_mosaic.version = 11 : i64} {
  func.func @_stats_kernel(%arg0: i32, %arg1: i32, %arg2: memref<16x4xf32, #tpu.memory_space<vmem>>, %arg3: memref<1x2x4xf32, #tpu.memory_space<vmem>>, %arg4: memref<3x4x32xf32, #tpu.memory_space<vmem>>, %arg5: memref<1x32xf32, #tpu.memory_space<vmem>>, %arg6: memref<1x1x32xf32, #tpu.memory_space<vmem>>) attributes {dimension_semantics = [#tpu.dimension_semantics<parallel>, #tpu.dimension_semantics<arbitrary>], iteration_bounds = array<i64: 2, 2>, scalar_prefetch = 0 : i64, scratch_operands = 0 : i64, tpu.core_type = #tpu.core_type<tc>, window_params = [{transform_indices = @transform_0, window_bounds = array<i64: 16, 4>}, {transform_indices = @transform_1, window_bounds = array<i64: 1, 2, 4>}, {pipeline_mode = #tpu.pipeline_mode<synchronous>, transform_indices = @transform_2, window_bounds = array<i64: 3, 4, 32>}, {pipeline_mode = #tpu.pipeline_mode<synchronous>, transform_indices = @transform_3, window_bounds = array<i64: 1, 32>}, {transform_indices = @transform_4, window_bounds = array<i64: 1, 1, 32>}]} {
    %c0_i32 = arith.constant 0 : i32
    %0 = arith.cmpi eq, %arg1, %c0_i32 : i32
    %1 = arith.extui %0 : i1 to i32
    %c0_i32_0 = arith.constant 0 : i32
    %2 = arith.cmpi ne, %1, %c0_i32_0 : i32
    scf.if %2 {
      %cst_28 = arith.constant 0.000000e+00 : f32
      %48 = vector.broadcast %cst_28 : f32 to vector<1x32xf32>
      %c0_29 = arith.constant 0 : index
      %c0_30 = arith.constant 0 : index
      %c0_31 = arith.constant 0 : index
      %49 = vector.load %arg6[%c0_29, %c0_30, %c0_31] : memref<1x1x32xf32, #tpu.memory_space<vmem>>, vector<1x1x32xf32>
      %50 = vector.shape_cast %49 : vector<1x1x32xf32> to vector<1x32xf32>
      %51 = vector.shape_cast %48 : vector<1x32xf32> to vector<1x1x32xf32>
      tpu.vector_store %arg6[%c0_29, %c0_30, %c0_31], %51 {strides = array<i32>} : memref<1x1x32xf32, #tpu.memory_space<vmem>>, vector<1x1x32xf32>,
    } else {
    }
    %c0 = arith.constant 0 : index
    %c0_1 = arith.constant 0 : index
    %3 = vector.load %arg2[%c0, %c0_1] : memref<16x4xf32, #tpu.memory_space<vmem>>, vector<16x4xf32>
    %c0_2 = arith.constant 0 : index
    %c0_3 = arith.constant 0 : index
    %c0_4 = arith.constant 0 : index
    %4 = vector.load %arg3[%c0_2, %c0_3, %c0_4] : memref<1x2x4xf32, #tpu.memory_space<vmem>>, vector<1x1x4xf32>
    %5 = vector.shape_cast %4 : vector<1x1x4xf32> to vector<1x4xf32>
    %6 = vector.extract_strided_slice %3 {offsets = [0, 0], sizes = [15, 4], strides = [1, 1]} : vector<16x4xf32> to vector<15x4xf32>
    %7 = tpu.concatenate %5, %6 in 0 : vector<1x4xf32>, vector<15x4xf32> -> vector<16x4xf32>
    %8 = vector.extract_strided_slice %3 {offsets = [1, 0], sizes = [15, 4], strides = [1, 1]} : vector<16x4xf32> to vector<15x4xf32>
    %c0_5 = arith.constant 0 : index
    %c1 = arith.constant 1 : index
    %c0_6 = arith.constant 0 : index
    %9 = vector.load %arg3[%c0_5, %c1, %c0_6] : memref<1x2x4xf32, #tpu.memory_space<vmem>>, vector<1x1x4xf32>
    %10 = vector.shape_cast %9 : vector<1x1x4xf32> to vector<1x4xf32>
    %11 = tpu.concatenate %8, %10 in 0 : vector<15x4xf32>, vector<1x4xf32> -> vector<16x4xf32>
    %c0_7 = arith.constant 0 : index
    %c0_8 = arith.constant 0 : index
    %c0_9 = arith.constant 0 : index
    %12 = vector.load %arg4[%c0_7, %c0_8, %c0_9] : memref<3x4x32xf32, #tpu.memory_space<vmem>>, vector<1x4x32xf32>
    %13 = vector.shape_cast %12 : vector<1x4x32xf32> to vector<4x32xf32>
    %cst = arith.constant dense<0.000000e+00> : vector<16x32xf32>
    %14 = tpu.matmul %7, %13, %cst {dimension_numbers = #tpu.dot_dimension_numbers<[1], [0], [0], [1], [0, 0, 1, 1], [], []>} : vector<16x4xf32>, vector<4x32xf32>, vector<16x32xf32> -> vector<16x32xf32>
    %c1_10 = arith.constant 1 : index
    %c0_11 = arith.constant 0 : index
    %c0_12 = arith.constant 0 : index
    %15 = vector.load %arg4[%c1_10, %c0_11, %c0_12] : memref<3x4x32xf32, #tpu.memory_space<vmem>>, vector<1x4x32xf32>
    %16 = vector.shape_cast %15 : vector<1x4x32xf32> to vector<4x32xf32>
    %cst_13 = arith.constant dense<0.000000e+00> : vector<16x32xf32>
    %17 = tpu.matmul %3, %16, %cst_13 {dimension_numbers = #tpu.dot_dimension_numbers<[1], [0], [0], [1], [0, 0, 1, 1], [], []>} : vector<16x4xf32>, vector<4x32xf32>, vector<16x32xf32> -> vector<16x32xf32>
    %18 = arith.addf %14, %17 : vector<16x32xf32>
    %c2 = arith.constant 2 : index
    %c0_14 = arith.constant 0 : index
    %c0_15 = arith.constant 0 : index
    %19 = vector.load %arg4[%c2, %c0_14, %c0_15] : memref<3x4x32xf32, #tpu.memory_space<vmem>>, vector<1x4x32xf32>
    %20 = vector.shape_cast %19 : vector<1x4x32xf32> to vector<4x32xf32>
    %cst_16 = arith.constant dense<0.000000e+00> : vector<16x32xf32>
    %21 = tpu.matmul %11, %20, %cst_16 {dimension_numbers = #tpu.dot_dimension_numbers<[1], [0], [0], [1], [0, 0, 1, 1], [], []>} : vector<16x4xf32>, vector<4x32xf32>, vector<16x32xf32> -> vector<16x32xf32>
    %22 = arith.addf %18, %21 : vector<16x32xf32>
    %c0_17 = arith.constant 0 : index
    %c0_18 = arith.constant 0 : index
    %23 = vector.load %arg5[%c0_17, %c0_18] : memref<1x32xf32, #tpu.memory_space<vmem>>, vector<1x32xf32>
    %24 = vector.broadcast %23 : vector<1x32xf32> to vector<16x32xf32>
    %25 = arith.subf %22, %24 : vector<16x32xf32>
    %c2_i32 = arith.constant 2 : i32
    %26 = arith.muli %arg0, %c2_i32 : i32
    %27 = arith.addi %26, %arg1 : i32
    %c2_i32_19 = arith.constant 2 : i32
    %28 = arith.remsi %27, %c2_i32_19 : i32
    %c16_i32 = arith.constant 16 : i32
    %29 = arith.muli %28, %c16_i32 : i32
    %30 = tpu.iota {dimensions = array<i32: 0>} : vector<16x1xi32>
    %31 = vector.broadcast %29 : i32 to vector<16x1xi32>
    %32 = arith.addi %31, %30 : vector<16x1xi32>
    %c24_i32 = arith.constant 24 : i32
    %33 = vector.broadcast %c24_i32 : i32 to vector<16x1xi32>
    %34 = arith.cmpi slt, %32, %33 : vector<16x1xi32>
    %35 = arith.mulf %25, %25 : vector<16x32xf32>
    %cst_20 = arith.constant 0.000000e+00 : f32
    %36 = vector.shape_cast %34 : vector<16x1xi1> to vector<16x1xi1>
    %37 = vector.broadcast %36 : vector<16x1xi1> to vector<16x32xi1>
    %38 = vector.broadcast %cst_20 : f32 to vector<16x32xf32>
    %39 = arith.select %37, %35, %38 : vector<16x32xi1>, vector<16x32xf32>
    %c0_21 = arith.constant 0 : index
    %c0_22 = arith.constant 0 : index
    %c0_23 = arith.constant 0 : index
    %40 = vector.load %arg6[%c0_21, %c0_22, %c0_23] : memref<1x1x32xf32, #tpu.memory_space<vmem>>, vector<1x1x32xf32>
    %41 = vector.shape_cast %40 : vector<1x1x32xf32> to vector<1x32xf32>
    %cst_24 = arith.constant dense<0.000000e+00> : vector<32xf32>
    %42 = vector.multi_reduction <add>, %39, %cst_24 [0] : vector<16x32xf32> to vector<32xf32>
    %43 = vector.shape_cast %42 : vector<32xf32> to vector<1x32xf32>
    %44 = arith.addf %41, %43 : vector<1x32xf32>
    %c0_25 = arith.constant 0 : index
    %c0_26 = arith.constant 0 : index
    %c0_27 = arith.constant 0 : index
    %45 = vector.load %arg6[%c0_25, %c0_26, %c0_27] : memref<1x1x32xf32, #tpu.memory_space<vmem>>, vector<1x1x32xf32>
    %46 = vector.shape_cast %45 : vector<1x1x32xf32> to vector<1x32xf32>
    %47 = vector.shape_cast %44 : vector<1x32xf32> to vector<1x1x32xf32>
    tpu.vector_store %arg6[%c0_25, %c0_26, %c0_27], %47 {strides = array<i32>} : memref<1x1x32xf32, #tpu.memory_space<vmem>>, vector<1x1x32xf32>,
    return
  }
  func.func @transform_0(%arg0: i32, %arg1: i32) -> (i32, i32) {
    %c2_i32 = arith.constant 2 : i32
    %0 = arith.muli %arg0, %c2_i32 : i32
    %1 = arith.addi %0, %arg1 : i32
    %c0_i32 = arith.constant 0 : i32
    %c0_i32_0 = arith.constant 0 : i32
    return %1, %c0_i32 : i32, i32
  }
  func.func @transform_1(%arg0: i32, %arg1: i32) -> (i32, i32, i32) {
    %c2_i32 = arith.constant 2 : i32
    %0 = arith.muli %arg0, %c2_i32 : i32
    %1 = arith.addi %0, %arg1 : i32
    %c0_i32 = arith.constant 0 : i32
    %c0_i32_0 = arith.constant 0 : i32
    %c0_i32_1 = arith.constant 0 : i32
    return %1, %c0_i32, %c0_i32_0 : i32, i32, i32
  }
  func.func @transform_2(%arg0: i32, %arg1: i32) -> (i32, i32, i32) {
    %c0_i32 = arith.constant 0 : i32
    %c0_i32_0 = arith.constant 0 : i32
    %c0_i32_1 = arith.constant 0 : i32
    %c0_i32_2 = arith.constant 0 : i32
    return %c0_i32, %c0_i32_0, %c0_i32_1 : i32, i32, i32
  }
  func.func @transform_3(%arg0: i32, %arg1: i32) -> (i32, i32) {
    %c0_i32 = arith.constant 0 : i32
    %c0_i32_0 = arith.constant 0 : i32
    %c0_i32_1 = arith.constant 0 : i32
    return %c0_i32, %c0_i32_0 : i32, i32
  }
  func.func @transform_4(%arg0: i32, %arg1: i32) -> (i32, i32, i32) {
    %c0_i32 = arith.constant 0 : i32
    %c0_i32_0 = arith.constant 0 : i32
    %c0_i32_1 = arith.constant 0 : i32
    return %arg0, %c0_i32, %c0_i32_0 : i32, i32, i32
  }
}

</mosaic_0001>

<llo_original>
// kernel: tpu_custom_call.1
$region0: #{tpu_custom_call.1}
  #allocation0 [shape = 'u32[]', space=smem, size = 0x4, offset = 0x4, fixed_abs, tag = 'smem constant byte address 0x4 - core index']
  #allocation1 [shape = 'u32[72,128]{1,0:T(1,128)}', space=vmem, size = 0x9000, scoped, tag = 'internal scratch']
  %s0 = inlined_call_operand.vmem [shape: f32[64,4], index: 0, kind: input, shape index: {}]
  %s1 = inlined_call_operand.vmem [shape: f32[4,2,4], index: 1, kind: input, shape index: {}]
  %s2 = inlined_call_operand.vmem [shape: f32[3,4,32], index: 2, kind: input, shape index: {}]
  %s3 = inlined_call_operand.vmem [shape: f32[1,32], index: 3, kind: input, shape index: {}]
  %s4 = inlined_call_operand.hbm [shape: f32[2,1,32], index: 4, kind: output, shape index: {}]
  %s5 = sld [smem:[#allocation0]]
  $region53: #{tpu_custom_call.1} parent=0
    _
  %s7 = ssub.s32 1, %s5
  %s8 = scalar_select 0, %s7, %s5
  $region1: #{tpu_custom_call.1} parent=0
    #allocation2 [shape = 'u8[1024]{0}', space=vmem, size = 0x400, scoped, tag = 'output window, operand 0']
    #allocation3 [shape = 's32[2]{0}', space=sflag, size = 0x8, scoped, tag = 'scoped memory for tpu_custom_call.1']
    %9 = vsyncpa [#allocation3], 0
    %s10 = scalar_lea.sflag [#allocation3], 1
    %11 = vsyncpa %s10, 0
    loop: start=0, step=1, limit=6
    $region2: #{tpu_custom_call.1} parent=1 // loop_pre_header
      _
    $region3: #{tpu_custom_call.1} parent=1 // loop_header
      %s13 = sphi 0, %s17
      %p14 = scmp.ge.s32.totalorder %s13, 6
      %s20 = sphi 0, %s32
      %s21 = sphi 0, %s28
      %s22 = sphi 0, %s20
      %s23 = sphi 0, %s21
      %s24 = sphi 0, %s22
      %s25 = sphi 0, %s23
      %s39 = sphi 0, %s41
      %s42 = sphi 0, %s39
      %s43 = sphi 0, %s42
      %s59 = sphi 0, %s43
      %s69 = sphi 0, %s71
      %s72 = sphi 0, %s69
      %s73 = sphi 0, %s72
      %s89 = sphi 0, %s73
      %s93 = sphi 0, %s93
      %s95 = sphi 0, %s93
      %s96 = sphi 0, %s95
      %s110 = sphi 0, %s96
      %s114 = sphi 0, %s114
      %s116 = sphi 0, %s114
      %s117 = sphi 0, %s116
      %s131 = sphi 0, %s117
      %s137 = sphi 0, %s139
      %s140 = sphi 0, %s137
      %s141 = sphi 0, %s140
      %s157 = sphi 0, %s141
    $region4: #{tpu_custom_call.1} parent=1 // loop_header_branch
      %16 = sbr.rel (%p14) target = $region8
    $region5: #{tpu_custom_call.1} parent=1 // loop_body
      %s18 = ssub.s32 %s13, 1
      %s19 = ssub.s32 %s13, 2
      %s26 = sadd.s32 1, %s21
      %p27 = scmp.ge.s32.totalorder %s26, 2
      %s28 = scalar_select %p27, 0, %s26
      %s29 = sadd.s32 1, %s20
      %s30 = scalar_select %p27, %s29, %s20
      %p31 = scmp.ge.s32.totalorder %s30, 2
      %s32 = scalar_select %p31, 0, %s30
      %s33 = smul.u32 %s20, 2
      %s34 = sadd.s32 %s33, %s21
      %s35 = smul.u32 %s32, 2
      %s36 = sadd.s32 %s35, %s28
      %s37 = ssub.s32 %s34, %s36
      %p38 = scmp.eq.s32.totalorder %s37, 0
      %s40 = sadd.s32 %s39, 1
      %s41 = scalar_select %p38, %s39, %s40
      %p44 = pneg %p38
      %p45 = scmp.eq.s32.totalorder %s13, 3
      %p46 = por %p44, %p45
      %p47 = scmp.ne.s32.totalorder %s39, %s42
      %p48 = scmp.eq.s32.totalorder %s13, 0
      %p49 = por %p47, %p48
      %p50 = scmp.ne.s32.totalorder %s39, %s42
      %p51 = scmp.eq.s32.totalorder %s18, 3
      %p52 = por %p50, %p51
      %p53 = scmp.ne.s32.totalorder %s42, %s43
      %p54 = scmp.eq.s32.totalorder %s18, 0
      %p55 = por %p53, %p54
      %p56 = scmp.ne.s32.totalorder %s42, %s43
      %p57 = scmp.eq.s32.totalorder %s19, 3
      %p58 = por %p56, %p57
      %p60 = scmp.ne.s32.totalorder %s43, %s59
      %p61 = scmp.eq.s32.totalorder %s19, 0
      %p62 = por %p60, %p61
      %s63 = smul.u32 %s20, 2
      %s64 = sadd.s32 %s63, %s21
      %s65 = smul.u32 %s32, 2
      %s66 = sadd.s32 %s65, %s28
      %s67 = ssub.s32 %s64, %s66
      %p68 = scmp.eq.s32.totalorder %s67, 0
      %s70 = sadd.s32 %s69, 1
      %s71 = scalar_select %p68, %s69, %s70
      %p74 = pneg %p68
      %p75 = scmp.eq.s32.totalorder %s13, 3
      %p76 = por %p74, %p75
      %p77 = scmp.ne.s32.totalorder %s69, %s72
      %p78 = scmp.eq.s32.totalorder %s13, 0
      %p79 = por %p77, %p78
      %p80 = scmp.ne.s32.totalorder %s69, %s72
      %p81 = scmp.eq.s32.totalorder %s18, 3
      %p82 = por %p80, %p81
      %p83 = scmp.ne.s32.totalorder %s72, %s73
      %p84 = scmp.eq.s32.totalorder %s18, 0
      %p85 = por %p83, %p84
      %p86 = scmp.ne.s32.totalorder %s72, %s73
      %p87 = scmp.eq.s32.totalorder %s19, 3
      %p88 = por %p86, %p87
      %p90 = scmp.ne.s32.totalorder %s73, %s89
      %p91 = scmp.eq.s32.totalorder %s19, 0
      %p92 = por %p90, %p91
      %s94 = sadd.s32 %s93, 1
      %p97 = scmp.eq.s32.totalorder %s13, 3
      %p98 = scmp.ne.s32.totalorder %s93, %s95
      %p99 = scmp.eq.s32.totalorder %s13, 0
      %p100 = por %p98, %p99
      %p101 = scmp.ne.s32.totalorder %s93, %s95
      %p102 = scmp.eq.s32.totalorder %s18, 3
      %p103 = por %p101, %p102
      %p104 = scmp.ne.s32.totalorder %s95, %s96
      %p105 = scmp.eq.s32.totalorder %s18, 0
      %p106 = por %p104, %p105
      %p107 = scmp.ne.s32.totalorder %s95, %s96
      %p108 = scmp.eq.s32.totalorder %s19, 3
      %p109 = por %p107, %p108
      %p111 = scmp.ne.s32.totalorder %s96, %s110
      %p112 = scmp.eq.s32.totalorder %s19, 0
      %p113 = por %p111, %p112
      %s115 = sadd.s32 %s114, 1
      %p118 = scmp.eq.s32.totalorder %s13, 3
      %p119 = scmp.ne.s32.totalorder %s114, %s116
      %p120 = scmp.eq.s32.totalorder %s13, 0
      %p121 = por %p119, %p120
      %p122 = scmp.ne.s32.totalorder %s114, %s116
      %p123 = scmp.eq.s32.totalorder %s18, 3
      %p124 = por %p122, %p123
      %p125 = scmp.ne.s32.totalorder %s116, %s117
      %p126 = scmp.eq.s32.totalorder %s18, 0
      %p127 = por %p125, %p126
      %p128 = scmp.ne.s32.totalorder %s116, %s117
      %p129 = scmp.eq.s32.totalorder %s19, 3
      %p130 = por %p128, %p129
      %p132 = scmp.ne.s32.totalorder %s117, %s131
      %p133 = scmp.eq.s32.totalorder %s19, 0
      %p134 = por %p132, %p133
      %s135 = ssub.s32 %s20, %s32
      %p136 = scmp.eq.s32.totalorder %s135, 0
      %s138 = sadd.s32 %s137, 1
      %s139 = scalar_select %p136, %s137, %s138
      %p142 = pneg %p136
      %p143 = scmp.eq.s32.totalorder %s13, 3
      %p144 = por %p142, %p143
      %p145 = scmp.ne.s32.totalorder %s137, %s140
      %p146 = scmp.eq.s32.totalorder %s13, 0
      %p147 = por %p145, %p146
      %p148 = scmp.ne.s32.totalorder %s137, %s140
      %p149 = scmp.eq.s32.totalorder %s18, 3
      %p150 = por %p148, %p149
      %p151 = scmp.ne.s32.totalorder %s140, %s141
      %p152 = scmp.eq.s32.totalorder %s18, 0
      %p153 = por %p151, %p152
      %p154 = scmp.ne.s32.totalorder %s140, %s141
      %p155 = scmp.eq.s32.totalorder %s19, 3
      %p156 = por %p154, %p155
      %p158 = scmp.ne.s32.totalorder %s141, %s157
      %p159 = scmp.eq.s32.totalorder %s19, 0
      %p160 = por %p158, %p159
      %p161 = scmp.le.s32.totalorder 1, %s13
      %p162 = scmp.lt.s32.totalorder %s13, 5
      %p163 = pnand %p161, %p162
      %p164 = pneg %p163
      // Predicated region
      $region9: #{tpu_custom_call.1} parent=5 // pred_check
        _
      $region10: #{tpu_custom_call.1} parent=5 // pred_check_branch
        %166 = sbr.rel (%p163) target = $region12
      $region11: #{tpu_custom_call.1} parent=5 // pred_region
        %s167 = ssub.s32 %s13, 1
        // Predicated region
        $region13: #{tpu_custom_call.1} parent=11 // pred_check
          %p168 = pneg %p106
        $region14: #{tpu_custom_call.1} parent=11 // pred_check_branch
          %170 = sbr.rel (%p168) target = $region16
        $region15: #{tpu_custom_call.1} parent=11 // pred_region
          _
        $region16: #{tpu_custom_call.1} parent=11 // pred_fallthru
          _
        // Predicated region
        $region17: #{tpu_custom_call.1} parent=11 // pred_check
          %p171 = pneg %p127
        $region18: #{tpu_custom_call.1} parent=11 // pred_check_branch
          %173 = sbr.rel (%p171) target = $region20
        $region19: #{tpu_custom_call.1} parent=11 // pred_region
          _
        $region20: #{tpu_custom_call.1} parent=11 // pred_fallthru
          _
      $region12: #{tpu_custom_call.1} parent=5 // pred_fallthru
        _
      %p174 = scmp.lt.s32.totalorder %s13, 4
      // Predicated region
      $region21: #{tpu_custom_call.1} parent=5 // pred_check
        %p175 = pneg %p174
      $region22: #{tpu_custom_call.1} parent=5 // pred_check_branch
        %177 = sbr.rel (%p175) target = $region24
      $region23: #{tpu_custom_call.1} parent=5 // pred_region
        // Predicated region
        $region25: #{tpu_custom_call.1} parent=23 // pred_check
          %p178 = pneg %p49
        $region26: #{tpu_custom_call.1} parent=23 // pred_check_branch
          %180 = sbr.rel (%p178) target = $region28
        $region27: #{tpu_custom_call.1} parent=23 // pred_region
          %s181 = smul.u32 %s20, 2
          %s182 = sadd.s32 %s181, %s21
          %s183 = smul.u32 2, %s182
          %p184 = scmp.lt.s32.totalorder %s183, 7
          %s185 = scalar_select %p184, %s183, 7
          %s186 = smul.addr %s185, 8
          %s187 = scalar_lea.vmem %s0, %s186
          %s188 = smul.u32 %s20, 2
          %s189 = sadd.s32 %s188, %s21
          %s190 = smul.u32 2, %s189
        $region28: #{tpu_custom_call.1} parent=23 // pred_fallthru
          _
        // Predicated region
        $region29: #{tpu_custom_call.1} parent=23 // pred_check
          %p191 = pneg %p79
        $region30: #{tpu_custom_call.1} parent=23 // pred_check_branch
          %193 = sbr.rel (%p191) target = $region32
        $region31: #{tpu_custom_call.1} parent=23 // pred_region
          %s194 = smul.u32 %s20, 2
          %s195 = sadd.s32 %s194, %s21
          %p196 = scmp.lt.s32.totalorder %s195, 3
          %s197 = scalar_select %p196, %s195, 3
          %s198 = smul.addr %s197, 2
          %s199 = scalar_lea.vmem %s1, %s198
          %s200 = smul.u32 %s20, 2
          %s201 = sadd.s32 %s200, %s21
        $region32: #{tpu_custom_call.1} parent=23 // pred_fallthru
          _
      $region24: #{tpu_custom_call.1} parent=5 // pred_fallthru
        _
      %p202 = scmp.le.s32.totalorder 1, %s13
      %p203 = scmp.lt.s32.totalorder %s13, 5
      %p204 = pnand %p202, %p203
      %p205 = pneg %p204
      // Predicated region
      $region33: #{tpu_custom_call.1} parent=5 // pred_check
        _
      $region34: #{tpu_custom_call.1} parent=5 // pred_check_branch
        %207 = sbr.rel (%p204) target = $region36
      $region35: #{tpu_custom_call.1} parent=5 // pred_region
        %s208 = ssub.s32 %s13, 1
        %s209 = smul.u32 %s22, 2
        %s210 = sadd.s32 %s209, %s23
        %s211 = smul.u32 2, %s210
        %p212 = scmp.lt.s32.totalorder %s211, 7
        %s213 = scalar_select %p212, %s211, 7
        %s214 = smul.addr %s213, 8
        %s215 = scalar_lea.vmem %s0, %s214
        %p216 = pneg %p55
        %p217 = pneg %p52
        %s218 = smul.u32 %s22, 2
        %s219 = sadd.s32 %s218, %s23
        %p220 = scmp.lt.s32.totalorder %s219, 3
        %s221 = scalar_select %p220, %s219, 3
        %s222 = smul.addr %s221, 2
        %s223 = scalar_lea.vmem %s1, %s222
        %p224 = pneg %p85
        %p225 = pneg %p82
        %p226 = pneg %p106
        %p227 = pneg %p103
        %p228 = pneg %p127
        %p229 = pneg %p124
        %p230 = pneg %p153
        %p231 = pneg %p150
        %s232 = sand.u32 %s140, 1
        %s233 = scalar_lea.sflag [#allocation3], %s232
        %s234 = sand.u32 %s140, 1
        %s235 = scalar_lea.vmem [#allocation2], %s234
        %s236 = smul.u32 %s22, 2
        %s237 = sadd.s32 %s236, %s23
        %s238 = smul.u32 2, %s237
        %p239 = scmp.lt.s32.totalorder %s238, 7
        %s240 = scalar_select %p239, %s238, 7
        %s241 = smul.addr %s240, 8
        %s242 = scalar_lea.vmem %s0, %s241
        %s243 = smul.u32 %s22, 2
        %s244 = sadd.s32 %s243, %s23
        %s245 = smul.u32 2, %s244
        %s246 = smul.u32 %s22, 2
        %s247 = sadd.s32 %s246, %s23
        %p248 = scmp.lt.s32.totalorder %s247, 3
        %s249 = scalar_select %p248, %s247, 3
        %s250 = smul.addr %s249, 2
        %s251 = scalar_lea.vmem %s1, %s250
        %s252 = smul.u32 %s22, 2
        %s253 = sadd.s32 %s252, %s23
        %p254 = scmp.eq.s32.totalorder %s23, 0
        // Predicated region
        $region37: #{tpu_custom_call.1} parent=35 // pred_check
          %p255 = pneg %p254
        $region38: #{tpu_custom_call.1} parent=35 // pred_check_branch
          %257 = sbr.rel (%p255) target = $region40
        $region39: #{tpu_custom_call.1} parent=35 // pred_region
          %vm258 = vcmask 253952
          %259 = vst.msk [vmem:[%s235] sm:$0x1] %vm258, 0.0
        $region40: #{tpu_custom_call.1} parent=35 // pred_fallthru
          _
        %v260 = vld [vmem:[%s242] sm:$0xff]
        %v261 = vld [vmem:[%s242 + $0x8] sm:$0xff]
        %v262 = vld [vmem:[%s251] sm:$0x1]
        %vm265 = vcmask 1040384
        %v266 = vrot.slane %v260, 7
        %v267 = vrot.slane %v261, 7
        %v268 = vsel %vm265, %v266, %v267
        %v270 = vsel %vm265, %v262, %v266
        %v271 = vld [vmem:[%s251 + $0x1] sm:$0x1]
        %vm272 = vcmask 1046528
        %v273 = vrot.slane %v260, 1
        %v274 = vrot.slane %v261, 1
        %v275 = vsel %vm272, %v273, %v274
        %v278 = vrot.slane %v271, 1
        %v280 = vsel %vm272, %v274, %v278
        %v281 = vld [vmem:[%s2] sm:$0xf]
        %s282 = scalar_lea.vmem %s2, 4
        %v283 = vld [vmem:[%s282] sm:$0xf]
        %vm284 = vcmask 31744
        %v285 = vsel %vm284, %v260, 0
        %v287 = vsel %vm284, %v261, 0
        %vm289 = vcmask 1043456
        %v291 = vsel %vm289, %v283, 0
        %293 = vmatpush.msra.mxu0 0.0
        %294 = vmatpush.msra.mxu0 0.0
        %295 = vmatpush.msra.mxu0 0.0
        %296 = vmatpush.msra.mxu0 0.0
        %297 = vmatpush.msra.mxu0 0.0
        %298 = vmatpush.msra.mxu0 0.0
        %299 = vmatpush.msra.mxu0 0.0
        %300 = vmatpush.msra.mxu0 0.0
        %301 = vmatpush.msra.mxu0 0.0
        %302 = vmatpush.msra.mxu0 0.0
        %303 = vmatpush.msra.mxu0 0.0
        %304 = vmatpush.msra.mxu0 0.0
        %305 = vmatpush.msra.mxu0 0.0
        %306 = vmatpush.msra.mxu0 0.0
        %307 = vmatpush.msra.mxu0 0.0
        %308 = vmatpush.msra.mxu0 %v291
        %309 = vmatmul.f32.gmra.mxu0 %v285
        %v310 = vpop.f32.mrf.mxu0
        %v311 = vadd.f32 0.0, %v310
        %312 = vmatmul.f32.gmra.mxu0 %v287
        %v313 = vpop.f32.mrf.mxu0
        %v314 = vadd.f32 0.0, %v313
        %315 = vdwg.mxu0
        %v317 = vsel %vm284, %v270, 0
        %v319 = vsel %vm284, %v268, 0
        %v322 = vsel %vm289, %v281, 0
        %324 = vmatpush.msra.mxu0 0.0
        %325 = vmatpush.msra.mxu0 0.0
        %326 = vmatpush.msra.mxu0 0.0
        %327 = vmatpush.msra.mxu0 0.0
        %328 = vmatpush.msra.mxu0 0.0
        %329 = vmatpush.msra.mxu0 0.0
        %330 = vmatpush.msra.mxu0 0.0
        %331 = vmatpush.msra.mxu0 0.0
        %332 = vmatpush.msra.mxu0 0.0
        %333 = vmatpush.msra.mxu0 0.0
        %334 = vmatpush.msra.mxu0 0.0
        %335 = vmatpush.msra.mxu0 0.0
        %336 = vmatpush.msra.mxu0 0.0
        %337 = vmatpush.msra.mxu0 0.0
        %338 = vmatpush.msra.mxu0 0.0
        %339 = vmatpush.msra.mxu0 %v322
        %340 = vmatmul.f32.gmra.mxu0 %v317
        %v341 = vpop.f32.mrf.mxu0
        %v342 = vadd.f32 %v311, %v341
        %343 = vmatmul.f32.gmra.mxu0 %v319
        %v344 = vpop.f32.mrf.mxu0
        %v345 = vadd.f32 %v314, %v344
        %346 = vdwg.mxu0
        %s347 = scalar_lea.vmem %s2, 8
        %v348 = vld [vmem:[%s347] sm:$0xf]
        %v349 = vsel %vm284, %v275, 0
        %v352 = vsel %vm284, %v280, 0
        %v355 = vsel %vm289, %v348, 0
        %357 = vmatpush.msra.mxu0 0.0
        %358 = vmatpush.msra.mxu0 0.0
        %359 = vmatpush.msra.mxu0 0.0
        %360 = vmatpush.msra.mxu0 0.0
        %361 = vmatpush.msra.mxu0 0.0
        %362 = vmatpush.msra.mxu0 0.0
        %363 = vmatpush.msra.mxu0 0.0
        %364 = vmatpush.msra.mxu0 0.0
        %365 = vmatpush.msra.mxu0 0.0
        %366 = vmatpush.msra.mxu0 0.0
        %367 = vmatpush.msra.mxu0 0.0
        %368 = vmatpush.msra.mxu0 0.0
        %369 = vmatpush.msra.mxu0 0.0
        %370 = vmatpush.msra.mxu0 0.0
        %371 = vmatpush.msra.mxu0 0.0
        %372 = vmatpush.msra.mxu0 %v355
        %373 = vmatmul.f32.gmra.mxu0 %v349
        %v374 = vpop.f32.mrf.mxu0
        %v375 = vadd.f32 0.0, %v374
        %376 = vmatmul.f32.gmra.mxu0 %v352
        %v377 = vpop.f32.mrf.mxu0
        %v378 = vadd.f32 0.0, %v377
        %379 = vdwg.mxu0
        %v380 = vadd.f32 %v342, %v375
        %v381 = vadd.f32 %v345, %v378
        %v382 = vld [vmem:[%s3] sm:$0x1]
        %v384 = vperm.slane %v382, 0
        %v386 = vsub.f32 %v380, %v384
        %v387 = vsub.f32 %v381, %v384
        %s388 = smul.u32 %s22, 2
        %s389 = sadd.s32 %s388, %s23
        %p390 = scmp.lt.s32.totalorder %s389, 0
        %s391 = ssub.s32 0, %s389
        %s392 = scalar_select %p390, %s391, %s389
        %s393 = sand.u32 %s392, 1
        %s394 = ssub.s32 0, %s393
        %s395 = scalar_select %p390, %s394, %s393
        %s396 = smul.u32 %s395, 16
        %v397 = vlaneseq
        %v398 = vshrl.u32 %v397, 7
        %v399 = vadd.s32 %v398, 8
        %v400 = vstv %s396
        %v401 = vadd.s32 %v400, %v398
        %v402 = vadd.s32 %v400, %v399
        %vm403 = vcmp.lt.s32.totalorder %v401, 24
        %vm404 = vcmp.lt.s32.totalorder %v402, 24
        %v405 = vmul.f32 %v386, %v386
        %v406 = vmul.f32 %v387, %v387
        %v407 = vsel %vm403, 1, 0
        %v408 = vsel %vm404, 1, 0
        %vm409 = vcmp.eq.s32.totalorder %v407, 1
        %vm410 = vcmp.eq.s32.totalorder %v408, 1
        %v411 = vsel %vm409, %v405, 0.0
        %v412 = vsel %vm410, %v406, 0.0
        %v413 = vld [vmem:[%s235] sm:$0x1]
        %vm414 = vcmask 261120
        %v415 = vsel %vm414, %v411, 0.0
        %v416 = vsel %vm414, %v412, 0.0
        %v417 = vadd.f32 %v415, %v416
        %v418 = vrot.slane %v417, 4
        %v419 = vadd.f32 %v417, %v418
        %v420 = vrot.slane %v419, 2
        %v421 = vadd.f32 %v419, %v420
        %v422 = vrot.slane %v421, 1
        %v423 = vadd.f32 %v421, %v422
        %v424 = vadd.f32 %v413, %v423
        %vm425 = vcmask 253952
        %426 = vst.msk [vmem:[%s235] sm:$0x1] %vm425, %v424
        %s427 = sand.u32 %s140, 1
        %s428 = scalar_lea.sflag [#allocation3], %s427
        %s429 = sand.u32 %s140, 1
        %s430 = scalar_lea.vmem [#allocation2], %s429
        // Predicated region
        $region41: #{tpu_custom_call.1} parent=35 // pred_check
          %p431 = pneg %p150
        $region42: #{tpu_custom_call.1} parent=35 // pred_check_branch
          %433 = sbr.rel (%p431) target = $region44
        $region43: #{tpu_custom_call.1} parent=35 // pred_region
          %435 = vsyncadd %s428, 0
          %s436 = scalar_lea.hbm %s4, %s22
          %s438 = sshll.u32 %s430, 4
          %s439 = int_to_ptr.vmem [resolvable:$true] %s438
          %s440 = sshll.u32 %s436, 4
          %s441 = int_to_ptr.hbm [resolvable:$true] %s440
          %443 = dma.vmem_to_hbm [thread:$0]  %s439, 16, %s441, %s428
        $region44: #{tpu_custom_call.1} parent=35 // pred_fallthru
          _
      $region36: #{tpu_custom_call.1} parent=5 // pred_fallthru
        _
      %p444 = scmp.le.s32.totalorder 2, %s13
      // Predicated region
      $region45: #{tpu_custom_call.1} parent=5 // pred_check
        %p445 = pneg %p444
      $region46: #{tpu_custom_call.1} parent=5 // pred_check_branch
        %447 = sbr.rel (%p445) target = $region48
      $region47: #{tpu_custom_call.1} parent=5 // pred_region
        %s448 = ssub.s32 %s13, 2
        // Predicated region
        $region49: #{tpu_custom_call.1} parent=47 // pred_check
          %p449 = pneg %p156
        $region50: #{tpu_custom_call.1} parent=47 // pred_check_branch
          %451 = sbr.rel (%p449) target = $region52
        $region51: #{tpu_custom_call.1} parent=47 // pred_region
          %s452 = sand.u32 %s141, 1
          %s453 = scalar_lea.sflag [#allocation3], %s452
          %s454 = sand.u32 %s141, 1
          %s455 = scalar_lea.vmem [#allocation2], %s454
          %457 = dma.done %s453, 16
        $region52: #{tpu_custom_call.1} parent=47 // pred_fallthru
          _
      $region48: #{tpu_custom_call.1} parent=5 // pred_fallthru
        _
    $region6: #{tpu_custom_call.1} parent=1 // loop_footer
      %s17 = sadd.s32 1, %s13
    $region7: #{tpu_custom_call.1} parent=1 // loop_footer_branch
      %12 = sbr.rel target = $region3
    $region8: #{tpu_custom_call.1} parent=1 // loop_exit
      _
    %458 = vsyncpa [#allocation3], 1
    %s459 = scalar_lea.sflag [#allocation3], 1
    %460 = vsyncpa %s459, 1

</llo_original>
